<compile_context>
chip_gen: v7x
topology: tpu7x:2x2x1
jax: 0.10.0
libtpu: 0.0.40
codegen_flags: <defaults>
</compile_context>

<pallas_src>
import functools
import math

import jax
import jax.numpy as jnp
from jax.experimental import pallas as pl
from jax.experimental.pallas import tpu as pltpu


# --------------------------------------------------------------------------
# Kernel
# --------------------------------------------------------------------------

def _rmsnorm_kernel(x_ref, w_ref, o_ref, *, eps):
    # Load one (tm, D) tile, compute stats in f32.
    x = x_ref[...].astype(jnp.float32)
    ms = jnp.mean(x * x, axis=-1, keepdims=True)
    y = x * jax.lax.rsqrt(ms + eps)
    # Match torch: normalized value is cast back to the input dtype *before*
    # the weight multiply (only matters for sub-f32 activations).
    y = y.astype(x_ref.dtype).astype(jnp.float32)
    o_ref[...] = (y * w_ref[...].astype(jnp.float32)).astype(o_ref.dtype)


# --------------------------------------------------------------------------
# Wrapper
# --------------------------------------------------------------------------

def _choose_row_tile(M, D, in_bytes, out_bytes):
    """Pick a row-tile size: multiple of 8, capped by a conservative VMEM budget
    (double-buffered input + output tiles), and by 512 rows (measured ~85% of
    HBM roofline at 512-row tiles)."""
    budget = 16 * 1024 * 1024                      # bytes for 2x(in+out) tiles
    per_row = 2 * D * (in_bytes + out_bytes)
    tm = budget // max(per_row, 1)
    tm = max(8, min(512, (tm // 8) * 8))
    if M <= tm:
        # Single block: block dim == full array dim is always a legal layout.
        return M
    return tm                                      # multiple of 8 -> ragged tail is legal


def pallas_rmsnorm(x, weight, eps=1e-5):
    """x: (..., D) activations; weight: (D,) scale. Returns same leading shape."""
    D = x.shape[-1]
    lead = x.shape[:-1]
    M = 1
    for s in lead:
        M *= s

    out_dtype = jnp.result_type(x.dtype, weight.dtype)   # torch promotion of (x.to(dtype) * weight)
    x2 = x.reshape(M, D)
    w2 = weight.reshape(1, D)

    in_bytes = jnp.dtype(x.dtype).itemsize
    out_bytes = jnp.dtype(out_dtype).itemsize
    tm = _choose_row_tile(M, D, in_bytes, out_bytes)
    grid = (pl.cdiv(M, tm),)

    cost = pl.CostEstimate(
        flops=4 * M * D,                   # square, reduce, scale, weight-mul
        transcendentals=M,                 # one rsqrt per row
        bytes_accessed=M * D * in_bytes + M * D * out_bytes + D * 4,
    )

    out2 = pl.pallas_call(
        functools.partial(_rmsnorm_kernel, eps=eps),
        out_shape=jax.ShapeDtypeStruct((M, D), out_dtype),
        grid=grid,
        in_specs=[
            pl.BlockSpec((tm, D), lambda i: (i, 0)),   # row tile of activations
            pl.BlockSpec((1, D), lambda i: (0, 0)),    # weight: same tiny block every step
        ],
        out_specs=pl.BlockSpec((tm, D), lambda i: (i, 0)),
        compiler_params=pltpu.CompilerParams(
            dimension_semantics=("parallel",),         # shard rows across TCs (megacore)
            vmem_limit_bytes=64 * 1024 * 1024,
        ),
        cost_estimate=cost,
    )(x2, w2)

    return out2.reshape(*lead, D)


# --------------------------------------------------------------------------
# Pure-JAX reference (mirrors the torch module exactly)
# --------------------------------------------------------------------------

def rmsnorm_ref(x, weight, eps=1e-5):
    xf = x.astype(jnp.float32)
    y = xf * jax.lax.rsqrt(jnp.mean(xf * xf, axis=-1, keepdims=True) + eps)
    y = y.astype(x.dtype)
    return y.astype(jnp.result_type(x.dtype, weight.dtype)) * weight


# --------------------------------------------------------------------------

if __name__ == "__main__":
    key = jax.random.PRNGKey(0)
    k1, k2, k3, k4 = jax.random.split(key, 4)

    # Case 1: small shape consistent with the module usage (B, S, dim).
    B, S, dim = 2, 8, 32
    x_small = jax.random.normal(k1, (B, S, dim), jnp.float32)
    w_small = 1.0 + 0.1 * jax.random.normal(k2, (dim,), jnp.float32)

    out_small = jax.block_until_ready(pallas_rmsnorm(x_small, w_small, eps=1e-5))
    ref_small = rmsnorm_ref(x_small, w_small, eps=1e-5)
    assert out_small.shape == (B, S, dim) and out_small.dtype == jnp.float32
    assert bool(jnp.all(jnp.isfinite(out_small)))
    assert bool(jnp.allclose(out_small, ref_small, rtol=1e-5, atol=1e-5))

    # Case 2: larger row count to exercise the multi-step (ragged) row-tiled grid.
    B2, S2, dim2 = 2, 300, 256          # M = 600 -> tiles of 512 + ragged 88
    x_big = jax.random.normal(k3, (B2, S2, dim2), jnp.float32)
    w_big = 1.0 + 0.1 * jax.random.normal(k4, (dim2,), jnp.float32)

    out_big = jax.block_until_ready(pallas_rmsnorm(x_big, w_big, eps=1e-5))
    ref_big = rmsnorm_ref(x_big, w_big, eps=1e-5)
    assert out_big.shape == (B2, S2, dim2) and out_big.dtype == jnp.float32
    assert bool(jnp.all(jnp.isfinite(out_big)))
    assert bool(jnp.allclose(out_big, ref_big, rtol=1e-5, atol=1e-5))

    print("KERNEL_OK")
</pallas_src>

<mosaic_0001>
module attributes {stable_mosaic.version = 11 : i64} {
  func.func @_rmsnorm_kernel(%arg0: i32, %arg1: memref<16x32xf32, #tpu.memory_space<vmem>>, %arg2: memref<1x32xf32, #tpu.memory_space<vmem>>, %arg3: memref<16x32xf32, #tpu.memory_space<vmem>>) attributes {dimension_semantics = [#tpu.dimension_semantics<parallel>], iteration_bounds = array<i64: 1>, scalar_prefetch = 0 : i64, scratch_operands = 0 : i64, tpu.core_type = #tpu.core_type<tc>, window_params = [{transform_indices = @transform_0, window_bounds = array<i64: 16, 32>}, {pipeline_mode = #tpu.pipeline_mode<synchronous>, transform_indices = @transform_1, window_bounds = array<i64: 1, 32>}, {transform_indices = @transform_2, window_bounds = array<i64: 16, 32>}]} {
    %c0 = arith.constant 0 : index
    %c0_0 = arith.constant 0 : index
    %0 = vector.load %arg1[%c0, %c0_0] : memref<16x32xf32, #tpu.memory_space<vmem>>, vector<16x32xf32>
    %1 = arith.mulf %0, %0 : vector<16x32xf32>
    %cst = arith.constant dense<0.000000e+00> : vector<16xf32>
    %2 = vector.multi_reduction <add>, %1, %cst [1] : vector<16x32xf32> to vector<16xf32>
    %3 = vector.shape_cast %2 : vector<16xf32> to vector<16x1xf32>
    %cst_1 = arith.constant 3.200000e+01 : f32
    %4 = vector.broadcast %cst_1 : f32 to vector<16x1xf32>
    %5 = arith.divf %3, %4 : vector<16x1xf32>
    %cst_2 = arith.constant 9.99999974E-6 : f32
    %6 = vector.broadcast %cst_2 : f32 to vector<16x1xf32>
    %7 = arith.addf %5, %6 : vector<16x1xf32>
    %8 = math.rsqrt %7 : vector<16x1xf32>
    %9 = vector.broadcast %8 : vector<16x1xf32> to vector<16x32xf32>
    %10 = arith.mulf %0, %9 : vector<16x32xf32>
    %c0_3 = arith.constant 0 : index
    %c0_4 = arith.constant 0 : index
    %11 = vector.load %arg2[%c0_3, %c0_4] : memref<1x32xf32, #tpu.memory_space<vmem>>, vector<1x32xf32>
    %12 = vector.broadcast %11 : vector<1x32xf32> to vector<16x32xf32>
    %13 = arith.mulf %10, %12 : vector<16x32xf32>
    %c0_5 = arith.constant 0 : index
    %c0_6 = arith.constant 0 : index
    %14 = vector.load %arg3[%c0_5, %c0_6] : memref<16x32xf32, #tpu.memory_space<vmem>>, vector<16x32xf32>
    tpu.vector_store %arg3[%c0_5, %c0_6], %13 {strides = array<i32>} : memref<16x32xf32, #tpu.memory_space<vmem>>, vector<16x32xf32>,
    return
  }
  func.func @transform_0(%arg0: i32) -> (i32, i32) {
    %c0_i32 = arith.constant 0 : i32
    %c0_i32_0 = arith.constant 0 : i32
    return %arg0, %c0_i32 : i32, i32
  }
  func.func @transform_1(%arg0: i32) -> (i32, i32) {
    %c0_i32 = arith.constant 0 : i32
    %c0_i32_0 = arith.constant 0 : i32
    %c0_i32_1 = arith.constant 0 : i32
    return %c0_i32, %c0_i32_0 : i32, i32
  }
  func.func @transform_2(%arg0: i32) -> (i32, i32) {
    %c0_i32 = arith.constant 0 : i32
    %c0_i32_0 = arith.constant 0 : i32
    return %arg0, %c0_i32 : i32, i32
  }
}

</mosaic_0001>

<llo_original>
// kernel: tpu_custom_call.1
$region0: #{tpu_custom_call.1}
  #allocation0 [shape = 'u32[]', space=smem, size = 0x4, offset = 0x4, fixed_abs, tag = 'smem constant byte address 0x4 - core index']
  #allocation1 [shape = 'u32[144,128]{1,0:T(1,128)}', space=vmem, size = 0x12000, scoped, tag = 'internal scratch']
  %s0 = inlined_call_operand.hbm [shape: f32[16,32], index: 0, kind: input, shape index: {}]
  %s1 = inlined_call_operand.hbm [shape: f32[1,32], index: 1, kind: input, shape index: {}]
  %s2 = inlined_call_operand.hbm [shape: f32[16,32], index: 2, kind: output, shape index: {}]
  %s3 = sld [smem:[#allocation0]]
  $region26: #{tpu_custom_call.1} parent=0
    _
  %s5 = ssub.s32 1, %s3
  %s6 = scalar_select 0, %s5, %s3
  $region1: #{tpu_custom_call.1} parent=0
    #allocation2 [shape = 'u8[8192]{0}', space=vmem, size = 0x2000, scoped, tag = 'input window, operand 0, single buffered']
    #allocation3 [shape = 's32[1]{0}', space=sflag, size = 0x4, scoped, tag = 'scoped memory for tpu_custom_call.1']
    #allocation4 [shape = 's32[1]{0}', space=sflag, size = 0x4, scoped, tag = 'scoped memory for tpu_custom_call.1']
    #allocation5 [shape = 'u8[512]{0}', space=vmem, size = 0x400, scoped, tag = 'input window, operand 1, single buffered']
    #allocation6 [shape = 's32[1]{0}', space=sflag, size = 0x4, scoped, tag = 'scoped memory for tpu_custom_call.1']
    #allocation7 [shape = 'u8[8192]{0}', space=vmem, size = 0x2000, scoped, tag = 'output window, operand 0, single buffered']
    %7 = vsyncpa [#allocation3], 0
    %8 = vsyncpa [#allocation6], 0
    %9 = vsyncpa [#allocation4], 0
    // Predicated region
    $region2: #{tpu_custom_call.1} parent=1 // pred_check
      _
    $region3: #{tpu_custom_call.1} parent=1 // pred_check_branch
      %11 = sbr.rel (0) target = $region5
    $region4: #{tpu_custom_call.1} parent=1 // pred_region
      %s13 = ssub.s32 256, 256
      %14 = vsyncadd [#allocation3], %s13
      %s15 = sshll.u32 [#allocation2], 4
      %s16 = int_to_ptr.vmem [resolvable:$true] %s15
      %21 = dma.hbm_to_vmem [thread:$0]  %s0, 256, %s16, [#allocation3], 128, 128, 8
    $region5: #{tpu_custom_call.1} parent=1 // pred_fallthru
      _
    // Predicated region
    $region6: #{tpu_custom_call.1} parent=1 // pred_check
      _
    $region7: #{tpu_custom_call.1} parent=1 // pred_check_branch
      %23 = sbr.rel (0) target = $region9
    $region8: #{tpu_custom_call.1} parent=1 // pred_region
      %s25 = ssub.s32 16, 16
      %26 = vsyncadd [#allocation6], %s25
      %s28 = sshll.u32 [#allocation5], 4
      %s29 = int_to_ptr.vmem [resolvable:$true] %s28
      %31 = dma.hbm_to_vmem [thread:$0]  %s1, 16, %s29, [#allocation6]
    $region9: #{tpu_custom_call.1} parent=1 // pred_fallthru
      _
    // Predicated region
    $region10: #{tpu_custom_call.1} parent=1 // pred_check
      _
    $region11: #{tpu_custom_call.1} parent=1 // pred_check_branch
      %33 = sbr.rel (0) target = $region13
    $region12: #{tpu_custom_call.1} parent=1 // pred_region
      %34 = dma.done [#allocation3], 256
    $region13: #{tpu_custom_call.1} parent=1 // pred_fallthru
      _
    // Predicated region
    $region14: #{tpu_custom_call.1} parent=1 // pred_check
      _
    $region15: #{tpu_custom_call.1} parent=1 // pred_check_branch
      %36 = sbr.rel (0) target = $region17
    $region16: #{tpu_custom_call.1} parent=1 // pred_region
      %37 = dma.done [#allocation6], 16
    $region17: #{tpu_custom_call.1} parent=1 // pred_fallthru
      _
    %v38 = vld [vmem:[#allocation2] sm:$0xff]
    %v39 = vld [vmem:[#allocation2 + $0x8] sm:$0xff]
    %v40 = vmul.f32 %v38, %v38
    %v41 = vmul.f32 %v39, %v39
    %vm42 = vcmask 261120
    %v43 = vsel %vm42, %v40, 0.0
    %44 = vadd.xlane.f32.xlu0 %v43
    %v45 = vpop.xlane.xlu0 %44
    %v46 = vsel %vm42, %v41, 0.0
    %47 = vadd.xlane.f32.xlu0 %v46
    %v48 = vpop.xlane.xlu0 %47
    %v49 = vrcp.pop 32.0
    %v50 = vmul.f32 %v45, %v49
    %v51 = vmul.f32 %v48, %v49
    %v52 = vadd.f32 %v50, 1e-05
    %v53 = vadd.f32 %v51, 1e-05
    %v54 = vrsqrt.pop %v52
    %v55 = vrsqrt.pop %v53
    %v56 = vmul.f32 %v38, %v54
    %v57 = vmul.f32 %v39, %v55
    %v58 = vld [vmem:[#allocation5] sm:$0x1]
    %v60 = vlaneseq
    %v61 = vshrl.u32 %v60, 7
    %v62 = vsub.s32 0, %v61
    %v63 = vrot.slane %v58, %v62
    %v65 = vmul.f32 %v56, %v63
    %v66 = vmul.f32 %v57, %v63
    %67 = vst.msk [vmem:[#allocation7] sm:$0xff] %vm42, %v65
    %68 = vst.msk [vmem:[#allocation7 + $0x8] sm:$0xff] %vm42, %v66
    // Predicated region
    $region18: #{tpu_custom_call.1} parent=1 // pred_check
      _
    $region19: #{tpu_custom_call.1} parent=1 // pred_check_branch
      %70 = sbr.rel (0) target = $region21
    $region20: #{tpu_custom_call.1} parent=1 // pred_region
      %s72 = ssub.s32 256, 256
      %73 = vsyncadd [#allocation4], %s72
      %s74 = sshll.u32 [#allocation7], 4
      %s75 = int_to_ptr.vmem [resolvable:$true] %s74
      %80 = dma.vmem_to_hbm [thread:$0]  %s75, 256, %s2, [#allocation4], 128, 128, 8
    $region21: #{tpu_custom_call.1} parent=1 // pred_fallthru
      _
    // Predicated region
    $region22: #{tpu_custom_call.1} parent=1 // pred_check
      _
    $region23: #{tpu_custom_call.1} parent=1 // pred_check_branch
      %82 = sbr.rel (0) target = $region25
    $region24: #{tpu_custom_call.1} parent=1 // pred_region
      %83 = dma.done [#allocation4], 256
    $region25: #{tpu_custom_call.1} parent=1 // pred_fallthru
      _
    %84 = vsyncpa [#allocation3], 1
    %85 = vsyncpa [#allocation6], 1
    %86 = vsyncpa [#allocation4], 1

</llo_original>
